<compile_context>
chip_gen: v7x
topology: tpu7x:2x2x1
jax: 0.10.0
libtpu: 0.0.40
codegen_flags: <defaults>
</compile_context>

<pallas_src>
import math

import jax
import jax.numpy as jnp
import numpy as np
from jax import lax
from jax.experimental import pallas as pl
from jax.experimental.pallas import tpu as pltpu


_SUPPORTED_DTYPES = (jnp.float32, jnp.bfloat16, jnp.float16)


def _make_kernel(g, w, s, x_dtype):
    """Kernel for one (rb, g*W) input block -> (rb, g*s^2*W) output block.

    For each of the g folded input rows (lane groups): one MXU matmul against the
    reduced one-hot column selector B (W, s*W), then s unrolled stores realizing
    the row repeat (which is contiguous lane tiling in row-major NCHW).
    """
    w_out = s * w          # upsampled row width
    s2w = s * w_out        # contiguous output chunk produced by one input row
    # fp16 has no native MXU path; route through f32 (exact: selector is one-hot).
    mxu_dtype = jnp.float32 if jnp.dtype(x_dtype) == jnp.dtype(jnp.float16) else jnp.dtype(x_dtype)

    def kernel(x_ref, o_ref):
        # One-hot selector: sel[r, c] = 1  iff  c // s == r, written as a range
        # compare (r*s <= c < r*s + s) so no vector integer div/mod is needed.
        r_ids = lax.broadcasted_iota(jnp.int32, (w, w_out), 0)
        c_ids = lax.broadcasted_iota(jnp.int32, (w, w_out), 1)
        lo = r_ids * s
        sel = ((c_ids >= lo) & (c_ids < lo + s)).astype(mxu_dtype)

        xv = x_ref[...].astype(mxu_dtype)
        for i in range(g):                       # folded input rows (lane groups)
            xi = xv if g == 1 else xv[:, i * w:(i + 1) * w]
            yi = jnp.dot(xi, sel, preferred_element_type=jnp.float32).astype(o_ref.dtype)
            for k in range(s):                   # row repeat == contiguous lane tiling
                base = i * s2w + k * w_out
                o_ref[:, base:base + w_out] = yi

    return kernel


def _pick_fold(w, s, r, itemsize):
    """Smallest row-fold factor g so the output row view is a multiple of 128 lanes."""
    s2w = s * s * w
    if s2w % 128 == 0:
        return 1
    g = 128 // math.gcd(s2w, 128)
    if r % g != 0 or 8 * g * (w + s2w) * itemsize > (2 << 20):
        # TODO(synk): row counts not divisible by the fold factor (or exotic huge
        # widths) fall back to a narrow, masked-store output view; correct but
        # below the HBM-store roofline.
        return 1
    return g


def _pick_row_block(r_g, bytes_per_row, *, target_bytes=4 << 20, min_steps=2):
    """Multiple-of-8 row block, ~target_bytes of in+out per block, >= min_steps steps.

    ~4 MiB per block double-buffers to ~8 MiB (no other VMEM operands), which fits
    v5e's 16 MiB scoped-VMEM default while sitting near the HBM roofline; at least
    2 grid steps lets the "parallel" axis use both v7x TensorCores.
    """
    if r_g <= 8:
        return r_g                      # single block; block dim == full dim is legal
    rb = min(r_g, max(8, target_bytes // max(1, bytes_per_row)))
    rb = min(rb, max(8, -(-r_g // min_steps)))   # keep >= min_steps grid steps
    rb = max(8, (rb // 8) * 8)
    return int(rb)


def upsample_nearest(x, scale_factor, *, row_block=None):
    """x: (N, C, H, W) -> (N, C, H*s, W*s), nearest interpolation, integer s."""
    n, c, h, w = x.shape
    sf = float(scale_factor)
    if not sf.is_integer() or sf < 1:
        # TODO(synk): non-integer scale factors need a per-row selector; the module
        # is used with integer factors (e.g. 2), which is what we support.
        raise NotImplementedError("upsample_nearest: integer scale_factor only")
    if jnp.dtype(x.dtype) not in [jnp.dtype(d) for d in _SUPPORTED_DTYPES]:
        raise NotImplementedError("upsample_nearest: float32/bfloat16/float16 only")
    s = int(sf)
    if s == 1:
        return x

    h_out, w_out = h * s, w * s
    s2w = s * s * w
    r = n * c * h
    itemsize = jnp.dtype(x.dtype).itemsize

    g = _pick_fold(w, s, r, itemsize)          # lane-fold factor (1 if already dense)
    r_g = r // g
    lanes_in = g * w
    lanes_out = g * s2w

    x2 = x.reshape(r_g, lanes_in)              # free, contiguous view

    bytes_per_row = (lanes_in + lanes_out) * itemsize
    rb = row_block if row_block is not None else _pick_row_block(r_g, bytes_per_row)
    assert rb == r_g or rb % 8 == 0, (rb, r_g)

    n_blocks = pl.cdiv(r_g, rb)
    r_pad = n_blocks * rb
    if r_pad != r_g:                           # ragged rows: pad, never one giant block
        x2 = jnp.pad(x2, ((0, r_pad - r_g), (0, 0)))

    kernel = _make_kernel(g, w, s, x.dtype)

    cost = pl.CostEstimate(
        flops=2 * r_pad * g * w * (s * w),     # g matmuls of (rb,W)@(W,sW) per block
        transcendentals=0,
        bytes_accessed=r_pad * bytes_per_row,
    )

    out2 = pl.pallas_call(
        kernel,
        out_shape=jax.ShapeDtypeStruct((r_pad, lanes_out), x.dtype),
        grid_spec=pltpu.PrefetchScalarGridSpec(
            num_scalar_prefetch=0,
            grid=(n_blocks,),
            in_specs=[pl.BlockSpec((rb, lanes_in), lambda i: (i, 0))],
            out_specs=pl.BlockSpec((rb, lanes_out), lambda i: (i, 0)),
        ),
        compiler_params=pltpu.CompilerParams(
            dimension_semantics=("parallel",),  # independent row blocks (2 TCs on v7x)
        ),
        cost_estimate=cost,
    )(x2)

    if r_pad != r_g:
        out2 = out2[:r_g]
    # Free metadata reshape: (R/g, g*s^2*W) row-major == (N, C, H*s, W*s) row-major.
    return out2.reshape(n, c, h_out, w_out)


if __name__ == "__main__":
    def ref_upsample(x, s):
        # Nearest-neighbor with integer scale == repeat along H and W.
        return jnp.repeat(jnp.repeat(x, s, axis=2), s, axis=3)

    key = jax.random.PRNGKey(0)

    # 1) Module-typical small shape: narrow width -> folded (128-lane) output blocks.
    n, c, h, w, s = 2, 4, 16, 16, 2
    x = jax.random.normal(key, (n, c, h, w), dtype=jnp.float32)
    out = jax.block_until_ready(upsample_nearest(x, s))
    assert out.shape == (n, c, h * s, w * s), out.shape
    np.testing.assert_array_equal(np.asarray(out), np.asarray(ref_upsample(x, s)))

    # 2) Forced small row block: exercises a multi-step pipelined grid.
    out_multi = jax.block_until_ready(upsample_nearest(x, s, row_block=8))
    np.testing.assert_array_equal(np.asarray(out_multi), np.asarray(ref_upsample(x, s)))

    # 3) Wide path (s*W multiple of 128): reduced selector + s aligned stores, g = 1.
    xw = jax.random.normal(jax.random.PRNGKey(1), (1, 2, 8, 128), dtype=jnp.float32)
    outw = jax.block_until_ready(upsample_nearest(xw, 2))
    np.testing.assert_array_equal(np.asarray(outw), np.asarray(ref_upsample(xw, 2)))

    # 4) Non-power-of-two scale factor + bf16 on the folded path.
    xb = jax.random.normal(jax.random.PRNGKey(2), (2, 4, 16, 16), dtype=jnp.bfloat16)
    outb = jax.block_until_ready(upsample_nearest(xb, 3))
    np.testing.assert_array_equal(
        np.asarray(outb.astype(jnp.float32)),
        np.asarray(ref_upsample(xb, 3).astype(jnp.float32)),
    )

    print("KERNEL_OK")
</pallas_src>

<mosaic_0001>
module attributes {stable_mosaic.version = 11 : i64} {
  func.func @kernel(%arg0: i32, %arg1: memref<32x32xf32, #tpu.memory_space<vmem>>, %arg2: memref<32x128xf32, #tpu.memory_space<vmem>>) attributes {dimension_semantics = [#tpu.dimension_semantics<parallel>], iteration_bounds = array<i64: 2>, scalar_prefetch = 0 : i64, scratch_operands = 0 : i64, tpu.core_type = #tpu.core_type<tc>, window_params = [{transform_indices = @transform_0, window_bounds = array<i64: 32, 32>}, {transform_indices = @transform_1, window_bounds = array<i64: 32, 128>}]} {
    %0 = tpu.iota {dimensions = array<i32: 0>} : vector<16x32xi32>
    %1 = tpu.iota {dimensions = array<i32: 1>} : vector<16x32xi32>
    %c2_i32 = arith.constant 2 : i32
    %2 = vector.broadcast %c2_i32 : i32 to vector<16x32xi32>
    %3 = arith.muli %0, %2 : vector<16x32xi32>
    %4 = arith.cmpi sge, %1, %3 : vector<16x32xi32>
    %c2_i32_0 = arith.constant 2 : i32
    %5 = vector.broadcast %c2_i32_0 : i32 to vector<16x32xi32>
    %6 = arith.addi %3, %5 : vector<16x32xi32>
    %7 = arith.cmpi slt, %1, %6 : vector<16x32xi32>
    %8 = arith.andi %4, %7 : vector<16x32xi1>
    %9 = arith.extui %8 : vector<16x32xi1> to vector<16x32xi32>
    %10 = arith.sitofp %9 : vector<16x32xi32> to vector<16x32xf32>
    %c0 = arith.constant 0 : index
    %c0_1 = arith.constant 0 : index
    %11 = vector.load %arg1[%c0, %c0_1] : memref<32x32xf32, #tpu.memory_space<vmem>>, vector<32x32xf32>
    %12 = vector.extract_strided_slice %11 {offsets = [0, 0], sizes = [32, 16], strides = [1, 1]} : vector<32x32xf32> to vector<32x16xf32>
    %cst = arith.constant dense<0.000000e+00> : vector<32x32xf32>
    %13 = tpu.matmul %12, %10, %cst {dimension_numbers = #tpu.dot_dimension_numbers<[1], [0], [0], [1], [0, 0, 1, 1], [], []>} : vector<32x16xf32>, vector<16x32xf32>, vector<32x32xf32> -> vector<32x32xf32>
    %c0_2 = arith.constant 0 : index
    %c0_3 = arith.constant 0 : index
    %14 = vector.load %arg2[%c0_2, %c0_3] : memref<32x128xf32, #tpu.memory_space<vmem>>, vector<32x32xf32>
    tpu.vector_store %arg2[%c0_2, %c0_3], %13 {strides = array<i32>} : memref<32x128xf32, #tpu.memory_space<vmem>>, vector<32x32xf32>,
    %c0_4 = arith.constant 0 : index
    %c32 = arith.constant 32 : index
    %15 = vector.load %arg2[%c0_4, %c32] : memref<32x128xf32, #tpu.memory_space<vmem>>, vector<32x32xf32>
    tpu.vector_store %arg2[%c0_4, %c32], %13 {strides = array<i32>} : memref<32x128xf32, #tpu.memory_space<vmem>>, vector<32x32xf32>,
    %16 = vector.extract_strided_slice %11 {offsets = [0, 16], sizes = [32, 16], strides = [1, 1]} : vector<32x32xf32> to vector<32x16xf32>
    %cst_5 = arith.constant dense<0.000000e+00> : vector<32x32xf32>
    %17 = tpu.matmul %16, %10, %cst_5 {dimension_numbers = #tpu.dot_dimension_numbers<[1], [0], [0], [1], [0, 0, 1, 1], [], []>} : vector<32x16xf32>, vector<16x32xf32>, vector<32x32xf32> -> vector<32x32xf32>
    %c0_6 = arith.constant 0 : index
    %c64 = arith.constant 64 : index
    %18 = vector.load %arg2[%c0_6, %c64] : memref<32x128xf32, #tpu.memory_space<vmem>>, vector<32x32xf32>
    tpu.vector_store %arg2[%c0_6, %c64], %17 {strides = array<i32>} : memref<32x128xf32, #tpu.memory_space<vmem>>, vector<32x32xf32>,
    %c0_7 = arith.constant 0 : index
    %c96 = arith.constant 96 : index
    %19 = vector.load %arg2[%c0_7, %c96] : memref<32x128xf32, #tpu.memory_space<vmem>>, vector<32x32xf32>
    tpu.vector_store %arg2[%c0_7, %c96], %17 {strides = array<i32>} : memref<32x128xf32, #tpu.memory_space<vmem>>, vector<32x32xf32>,
    return
  }
  func.func @transform_0(%arg0: i32) -> (i32, i32) {
    %c0_i32 = arith.constant 0 : i32
    %c0_i32_0 = arith.constant 0 : i32
    return %arg0, %c0_i32 : i32, i32
  }
  func.func @transform_1(%arg0: i32) -> (i32, i32) {
    %c0_i32 = arith.constant 0 : i32
    %c0_i32_0 = arith.constant 0 : i32
    return %arg0, %c0_i32 : i32, i32
  }
}

</mosaic_0001>

<llo_original>
// kernel: tpu_custom_call.1
$region0: #{tpu_custom_call.1}
  #allocation0 [shape = 'u32[]', space=smem, size = 0x4, offset = 0x4, fixed_abs, tag = 'smem constant byte address 0x4 - core index']
  #allocation1 [shape = 'u32[144,128]{1,0:T(1,128)}', space=vmem, size = 0x12000, scoped, tag = 'internal scratch']
  %s0 = inlined_call_operand.vmem [shape: f32[64,32], index: 0, kind: input, shape index: {}]
  %s1 = inlined_call_operand.hbm [shape: f32[64,128], index: 1, kind: output, shape index: {}]
  %s2 = sld [smem:[#allocation0]]
  $region37: #{tpu_custom_call.1} parent=0
    _
  %s4 = ssub.s32 1, %s2
  %s5 = scalar_select 0, %s4, %s2
  $region1: #{tpu_custom_call.1} parent=0
    #allocation2 [shape = 'u8[32768]{0}', space=vmem, size = 0x8000, scoped, tag = 'output window, operand 0']
    #allocation3 [shape = 's32[2]{0}', space=sflag, size = 0x8, scoped, tag = 'scoped memory for tpu_custom_call.1']
    %6 = vsyncpa [#allocation3], 0
    %s7 = scalar_lea.sflag [#allocation3], 1
    %8 = vsyncpa %s7, 0
    loop: start=0, step=1, limit=4
    $region2: #{tpu_custom_call.1} parent=1 // loop_pre_header
      _
    $region3: #{tpu_custom_call.1} parent=1 // loop_header
      %s10 = sphi 0, %s14
      %p11 = scmp.ge.s32.totalorder %s10, 4
      %s20 = sphi 0, %s22
      %s23 = sphi 0, %s20
      %s24 = sphi 0, %s23
      %s40 = sphi 0, %s24
      %s46 = sphi 0, %s48
      %s49 = sphi 0, %s46
      %s50 = sphi 0, %s49
      %s66 = sphi 0, %s50
    $region4: #{tpu_custom_call.1} parent=1 // loop_header_branch
      %13 = sbr.rel (%p11) target = $region8
    $region5: #{tpu_custom_call.1} parent=1 // loop_body
      %s15 = ssub.s32 %s10, 1
      %s16 = ssub.s32 %s10, 2
      %s17 = sadd.s32 %s10, 1
      %s18 = ssub.s32 %s10, %s17
      %p19 = scmp.eq.s32.totalorder %s18, 0
      %s21 = sadd.s32 %s20, 1
      %s22 = scalar_select %p19, %s20, %s21
      %p25 = pneg %p19
      %p26 = scmp.eq.s32.totalorder %s10, 1
      %p27 = por %p25, %p26
      %p28 = scmp.ne.s32.totalorder %s20, %s23
      %p29 = scmp.eq.s32.totalorder %s10, 0
      %p30 = por %p28, %p29
      %p31 = scmp.ne.s32.totalorder %s20, %s23
      %p32 = scmp.eq.s32.totalorder %s15, 1
      %p33 = por %p31, %p32
      %p34 = scmp.ne.s32.totalorder %s23, %s24
      %p35 = scmp.eq.s32.totalorder %s15, 0
      %p36 = por %p34, %p35
      %p37 = scmp.ne.s32.totalorder %s23, %s24
      %p38 = scmp.eq.s32.totalorder %s16, 1
      %p39 = por %p37, %p38
      %p41 = scmp.ne.s32.totalorder %s24, %s40
      %p42 = scmp.eq.s32.totalorder %s16, 0
      %p43 = por %p41, %p42
      %s44 = ssub.s32 %s10, %s17
      %p45 = scmp.eq.s32.totalorder %s44, 0
      %s47 = sadd.s32 %s46, 1
      %s48 = scalar_select %p45, %s46, %s47
      %p51 = pneg %p45
      %p52 = scmp.eq.s32.totalorder %s10, 1
      %p53 = por %p51, %p52
      %p54 = scmp.ne.s32.totalorder %s46, %s49
      %p55 = scmp.eq.s32.totalorder %s10, 0
      %p56 = por %p54, %p55
      %p57 = scmp.ne.s32.totalorder %s46, %s49
      %p58 = scmp.eq.s32.totalorder %s15, 1
      %p59 = por %p57, %p58
      %p60 = scmp.ne.s32.totalorder %s49, %s50
      %p61 = scmp.eq.s32.totalorder %s15, 0
      %p62 = por %p60, %p61
      %p63 = scmp.ne.s32.totalorder %s49, %s50
      %p64 = scmp.eq.s32.totalorder %s16, 1
      %p65 = por %p63, %p64
      %p67 = scmp.ne.s32.totalorder %s50, %s66
      %p68 = scmp.eq.s32.totalorder %s16, 0
      %p69 = por %p67, %p68
      %p70 = scmp.le.s32.totalorder 1, %s10
      %p71 = scmp.lt.s32.totalorder %s10, 3
      %p72 = pnand %p70, %p71
      %p73 = pneg %p72
      // Predicated region
      $region9: #{tpu_custom_call.1} parent=5 // pred_check
        _
      $region10: #{tpu_custom_call.1} parent=5 // pred_check_branch
        %75 = sbr.rel (%p72) target = $region12
      $region11: #{tpu_custom_call.1} parent=5 // pred_region
        %s76 = ssub.s32 %s10, 1
      $region12: #{tpu_custom_call.1} parent=5 // pred_fallthru
        _
      %p77 = scmp.lt.s32.totalorder %s10, 2
      // Predicated region
      $region13: #{tpu_custom_call.1} parent=5 // pred_check
        %p78 = pneg %p77
      $region14: #{tpu_custom_call.1} parent=5 // pred_check_branch
        %80 = sbr.rel (%p78) target = $region16
      $region15: #{tpu_custom_call.1} parent=5 // pred_region
        // Predicated region
        $region17: #{tpu_custom_call.1} parent=15 // pred_check
          %p81 = pneg %p30
        $region18: #{tpu_custom_call.1} parent=15 // pred_check_branch
          %83 = sbr.rel (%p81) target = $region20
        $region19: #{tpu_custom_call.1} parent=15 // pred_region
          %s84 = smul.u32 4, %s10
          %p85 = scmp.lt.s32.totalorder %s84, 7
          %s86 = scalar_select %p85, %s84, 7
          %s87 = smul.addr %s86, 8
          %s88 = scalar_lea.vmem %s0, %s87
          %s89 = smul.u32 4, %s10
        $region20: #{tpu_custom_call.1} parent=15 // pred_fallthru
          _
      $region16: #{tpu_custom_call.1} parent=5 // pred_fallthru
        _
      %p90 = scmp.le.s32.totalorder 1, %s10
      %p91 = scmp.lt.s32.totalorder %s10, 3
      %p92 = pnand %p90, %p91
      %p93 = pneg %p92
      // Predicated region
      $region21: #{tpu_custom_call.1} parent=5 // pred_check
        _
      $region22: #{tpu_custom_call.1} parent=5 // pred_check_branch
        %95 = sbr.rel (%p92) target = $region24
      $region23: #{tpu_custom_call.1} parent=5 // pred_region
        %s96 = ssub.s32 %s10, 1
        %s97 = smul.u32 4, %s15
        %p98 = scmp.lt.s32.totalorder %s97, 7
        %s99 = scalar_select %p98, %s97, 7
        %s100 = smul.addr %s99, 8
        %s101 = scalar_lea.vmem %s0, %s100
        %p102 = pneg %p36
        %p103 = pneg %p33
        %p104 = pneg %p62
        %p105 = pneg %p59
        %s106 = sand.u32 %s49, 1
        %s107 = scalar_lea.sflag [#allocation3], %s106
        %s108 = sand.u32 %s49, 1
        %s109 = smul.addr %s108, 32
        %s110 = scalar_lea.vmem [#allocation2], %s109
        %s111 = smul.u32 4, %s15
        %p112 = scmp.lt.s32.totalorder %s111, 7
        %s113 = scalar_select %p112, %s111, 7
        %s114 = smul.addr %s113, 8
        %s115 = scalar_lea.vmem %s0, %s114
        %s116 = smul.u32 4, %s15
        %s117 = smul.u32 4, %s15
        %v118 = vlaneseq
        %v119 = vshrl.u32 %v118, 7
        %v120 = vadd.s32 %v119, 8
        %v121 = vlaneseq
        %v122 = vand.u32 %v121, 127
        %v123 = vmul.u32 %v119, 2
        %v124 = vmul.u32 %v120, 2
        %vm125 = vcmp.ge.s32.totalorder %v122, %v123
        %vm126 = vcmp.ge.s32.totalorder %v122, %v124
        %v127 = vadd.s32 %v123, 2
        %v128 = vadd.s32 %v124, 2
        %vm129 = vcmp.lt.s32.totalorder %v122, %v127
        %vm130 = vcmp.lt.s32.totalorder %v122, %v128
        %vm131 = vmand %vm125, %vm129
        %vm132 = vmand %vm126, %vm130
        %v133 = vsel %vm131, 1, 0
        %v134 = vsel %vm132, 1, 0
        %v135 = vcvt.s32.f32 %v133
        %v136 = vcvt.s32.f32 %v134
        %v137 = vld [vmem:[%s115] sm:$0xff]
        %v138 = vld [vmem:[%s115 + $0x8] sm:$0xff]
        %v139 = vld [vmem:[%s115 + $0x10] sm:$0xff]
        %v140 = vld [vmem:[%s115 + $0x18] sm:$0xff]
        %vm141 = vcmask 130048
        %v143 = vsel %vm141, %v137, 0
        %v146 = vsel %vm141, %v138, 0
        %v149 = vsel %vm141, %v139, 0
        %v152 = vsel %vm141, %v140, 0
        %154 = vmatprep.subr.mxu0 0.0
        %155 = vmatpush1.msra.mxu0 %v135
        %156 = vmatprep.subr.mxu0 0.0
        %157 = vmatpush1.msra.mxu0 %v136
        %158 = vmatprep.subr.mxu0 0.0
        %159 = vmatpush1.msra.mxu0 0.0
        %160 = vmatprep.subr.mxu0 0.0
        %161 = vmatpush1.msra.mxu0 0.0
        %162 = vmatprep.subr.mxu0 0.0
        %163 = vmatpush1.msra.mxu0 0.0
        %164 = vmatprep.subr.mxu0 0.0
        %165 = vmatpush1.msra.mxu0 0.0
        %166 = vmatprep.subr.mxu0 0.0
        %167 = vmatpush1.msra.mxu0 0.0
        %168 = vmatprep.subr.mxu0 0.0
        %169 = vmatpush1.msra.mxu0 0.0
        %170 = vmatprep.subr.mxu0 0.0
        %171 = vmatpush1.msra.mxu0 0.0
        %172 = vmatprep.subr.mxu0 0.0
        %173 = vmatpush1.msra.mxu0 0.0
        %174 = vmatprep.subr.mxu0 0.0
        %175 = vmatpush1.msra.mxu0 0.0
        %176 = vmatprep.subr.mxu0 0.0
        %177 = vmatpush1.msra.mxu0 0.0
        %178 = vmatprep.subr.mxu0 0.0
        %179 = vmatpush1.msra.mxu0 0.0
        %180 = vmatprep.subr.mxu0 0.0
        %181 = vmatpush1.msra.mxu0 0.0
        %182 = vmatprep.subr.mxu0 0.0
        %183 = vmatpush1.msra.mxu0 0.0
        %184 = vmatprep.subr.mxu0 0.0
        %185 = vmatpush1.msra.mxu0 0.0
        %186 = vmatprep.subr.mxu0 0.0
        %187 = vmatpush1.msra.mxu0 0.0
        %188 = vmatprep.subr.mxu0 0.0
        %189 = vmatpush1.msra.mxu0 0.0
        %190 = vmatprep.subr.mxu0 0.0
        %191 = vmatpush1.msra.mxu0 0.0
        %192 = vmatprep.subr.mxu0 0.0
        %193 = vmatpush1.msra.mxu0 0.0
        %194 = vmatprep.subr.mxu0 0.0
        %195 = vmatpush1.msra.mxu0 0.0
        %196 = vmatprep.subr.mxu0 0.0
        %197 = vmatpush1.msra.mxu0 0.0
        %198 = vmatprep.subr.mxu0 0.0
        %199 = vmatpush1.msra.mxu0 0.0
        %200 = vmatprep.subr.mxu0 0.0
        %201 = vmatpush1.msra.mxu0 0.0
        %202 = vmatprep.subr.mxu0 0.0
        %203 = vmatpush1.msra.mxu0 0.0
        %204 = vmatprep.subr.mxu0 0.0
        %205 = vmatpush1.msra.mxu0 0.0
        %206 = vmatprep.subr.mxu0 0.0
        %207 = vmatpush1.msra.mxu0 0.0
        %208 = vmatprep.subr.mxu0 0.0
        %209 = vmatpush1.msra.mxu0 0.0
        %210 = vmatprep.subr.mxu0 0.0
        %211 = vmatpush1.msra.mxu0 0.0
        %212 = vmatprep.subr.mxu0 0.0
        %213 = vmatpush1.msra.mxu0 0.0
        %214 = vmatprep.subr.mxu0 0.0
        %215 = vmatpush1.msra.mxu0 0.0
        %216 = vmatprep.subr.mxu0 0.0
        %217 = vmatpush1.msra.mxu0 0.0
        %218 = vmatprep.mubr.f32.mxu0 0.0
        %219 = vmatmul.mubr.f32.gmra.mrb[0].mxu0 %v143
        %v220 = vpop.f32.mrb[0].mxu0
        %v221 = vadd.f32 0.0, %v220
        %v222 = vpop.f32.mrb[0].mxu0
        %223 = vmatprep.mubr.f32.mxu0 0.0
        %224 = vmatmul.mubr.f32.gmra.mrb[0].mxu0 %v146
        %v225 = vpop.f32.mrb[0].mxu0
        %v226 = vadd.f32 0.0, %v225
        %v227 = vpop.f32.mrb[0].mxu0
        %228 = vmatprep.mubr.f32.mxu0 0.0
        %229 = vmatmul.mubr.f32.gmra.mrb[0].mxu0 %v149
        %v230 = vpop.f32.mrb[0].mxu0
        %v231 = vadd.f32 0.0, %v230
        %v232 = vpop.f32.mrb[0].mxu0
        %233 = vmatprep.mubr.f32.mxu0 0.0
        %234 = vmatmul.mubr.f32.gmra.mrb[0].mxu0 %v152
        %v235 = vpop.f32.mrb[0].mxu0
        %v236 = vadd.f32 0.0, %v235
        %v237 = vpop.f32.mrb[0].mxu0
        %238 = vdwg.mxu0
        %vm239 = vcmask 261120
        %240 = vst.msk [vmem:[%s110] sm:$0xff] %vm239, %v221
        %241 = vst.msk [vmem:[%s110 + $0x8] sm:$0xff] %vm239, %v226
        %242 = vst.msk [vmem:[%s110 + $0x10] sm:$0xff] %vm239, %v231
        %243 = vst.msk [vmem:[%s110 + $0x18] sm:$0xff] %vm239, %v236
        %248 = vrot.lane.b32.xlu0 %v221, 32
        %v249 = vpop.permute.xlu0 %248
        %250 = vrot.lane.b32.xlu0 %v226, 32
        %v251 = vpop.permute.xlu0 %250
        %252 = vrot.lane.b32.xlu0 %v231, 32
        %v253 = vpop.permute.xlu0 %252
        %254 = vrot.lane.b32.xlu0 %v236, 32
        %v255 = vpop.permute.xlu0 %254
        %vm260 = vcmask 523520
        %261 = vst.msk [vmem:[%s110] sm:$0xff] %vm260, %v249
        %262 = vst.msk [vmem:[%s110 + $0x8] sm:$0xff] %vm260, %v251
        %263 = vst.msk [vmem:[%s110 + $0x10] sm:$0xff] %vm260, %v253
        %264 = vst.msk [vmem:[%s110 + $0x18] sm:$0xff] %vm260, %v255
        %265 = vrot.lane.b32.xlu0 %v137, 112
        %v266 = vpop.permute.xlu0 %265
        %267 = vrot.lane.b32.xlu0 %v138, 112
        %v268 = vpop.permute.xlu0 %267
        %269 = vrot.lane.b32.xlu0 %v139, 112
        %v270 = vpop.permute.xlu0 %269
        %271 = vrot.lane.b32.xlu0 %v140, 112
        %v272 = vpop.permute.xlu0 %271
        %v273 = vsel %vm141, %v266, 0
        %v275 = vsel %vm141, %v268, 0
        %v277 = vsel %vm141, %v270, 0
        %v279 = vsel %vm141, %v272, 0
        %281 = vmatprep.subr.mxu0 0.0
        %282 = vmatpush1.msra.mxu0 %v135
        %283 = vmatprep.subr.mxu0 0.0
        %284 = vmatpush1.msra.mxu0 %v136
        %285 = vmatprep.subr.mxu0 0.0
        %286 = vmatpush1.msra.mxu0 0.0
        %287 = vmatprep.subr.mxu0 0.0
        %288 = vmatpush1.msra.mxu0 0.0
        %289 = vmatprep.subr.mxu0 0.0
        %290 = vmatpush1.msra.mxu0 0.0
        %291 = vmatprep.subr.mxu0 0.0
        %292 = vmatpush1.msra.mxu0 0.0
        %293 = vmatprep.subr.mxu0 0.0
        %294 = vmatpush1.msra.mxu0 0.0
        %295 = vmatprep.subr.mxu0 0.0
        %296 = vmatpush1.msra.mxu0 0.0
        %297 = vmatprep.subr.mxu0 0.0
        %298 = vmatpush1.msra.mxu0 0.0
        %299 = vmatprep.subr.mxu0 0.0
        %300 = vmatpush1.msra.mxu0 0.0
        %301 = vmatprep.subr.mxu0 0.0
        %302 = vmatpush1.msra.mxu0 0.0
        %303 = vmatprep.subr.mxu0 0.0
        %304 = vmatpush1.msra.mxu0 0.0
        %305 = vmatprep.subr.mxu0 0.0
        %306 = vmatpush1.msra.mxu0 0.0
        %307 = vmatprep.subr.mxu0 0.0
        %308 = vmatpush1.msra.mxu0 0.0
        %309 = vmatprep.subr.mxu0 0.0
        %310 = vmatpush1.msra.mxu0 0.0
        %311 = vmatprep.subr.mxu0 0.0
        %312 = vmatpush1.msra.mxu0 0.0
        %313 = vmatprep.subr.mxu0 0.0
        %314 = vmatpush1.msra.mxu0 0.0
        %315 = vmatprep.subr.mxu0 0.0
        %316 = vmatpush1.msra.mxu0 0.0
        %317 = vmatprep.subr.mxu0 0.0
        %318 = vmatpush1.msra.mxu0 0.0
        %319 = vmatprep.subr.mxu0 0.0
        %320 = vmatpush1.msra.mxu0 0.0
        %321 = vmatprep.subr.mxu0 0.0
        %322 = vmatpush1.msra.mxu0 0.0
        %323 = vmatprep.subr.mxu0 0.0
        %324 = vmatpush1.msra.mxu0 0.0
        %325 = vmatprep.subr.mxu0 0.0
        %326 = vmatpush1.msra.mxu0 0.0
        %327 = vmatprep.subr.mxu0 0.0
        %328 = vmatpush1.msra.mxu0 0.0
        %329 = vmatprep.subr.mxu0 0.0
        %330 = vmatpush1.msra.mxu0 0.0
        %331 = vmatprep.subr.mxu0 0.0
        %332 = vmatpush1.msra.mxu0 0.0
        %333 = vmatprep.subr.mxu0 0.0
        %334 = vmatpush1.msra.mxu0 0.0
        %335 = vmatprep.subr.mxu0 0.0
        %336 = vmatpush1.msra.mxu0 0.0
        %337 = vmatprep.subr.mxu0 0.0
        %338 = vmatpush1.msra.mxu0 0.0
        %339 = vmatprep.subr.mxu0 0.0
        %340 = vmatpush1.msra.mxu0 0.0
        %341 = vmatprep.subr.mxu0 0.0
        %342 = vmatpush1.msra.mxu0 0.0
        %343 = vmatprep.subr.mxu0 0.0
        %344 = vmatpush1.msra.mxu0 0.0
        %345 = vmatprep.mubr.f32.mxu0 0.0
        %346 = vmatmul.mubr.f32.gmra.mrb[0].mxu0 %v273
        %v347 = vpop.f32.mrb[0].mxu0
        %v348 = vadd.f32 0.0, %v347
        %v349 = vpop.f32.mrb[0].mxu0
        %350 = vmatprep.mubr.f32.mxu0 0.0
        %351 = vmatmul.mubr.f32.gmra.mrb[0].mxu0 %v275
        %v352 = vpop.f32.mrb[0].mxu0
        %v353 = vadd.f32 0.0, %v352
        %v354 = vpop.f32.mrb[0].mxu0
        %355 = vmatprep.mubr.f32.mxu0 0.0
        %356 = vmatmul.mubr.f32.gmra.mrb[0].mxu0 %v277
        %v357 = vpop.f32.mrb[0].mxu0
        %v358 = vadd.f32 0.0, %v357
        %v359 = vpop.f32.mrb[0].mxu0
        %360 = vmatprep.mubr.f32.mxu0 0.0
        %361 = vmatmul.mubr.f32.gmra.mrb[0].mxu0 %v279
        %v362 = vpop.f32.mrb[0].mxu0
        %v363 = vadd.f32 0.0, %v362
        %v364 = vpop.f32.mrb[0].mxu0
        %365 = vdwg.mxu0
        %370 = vrot.lane.b32.xlu0 %v348, 64
        %v371 = vpop.permute.xlu0 %370
        %372 = vrot.lane.b32.xlu0 %v353, 64
        %v373 = vpop.permute.xlu0 %372
        %374 = vrot.lane.b32.xlu0 %v358, 64
        %v375 = vpop.permute.xlu0 %374
        %376 = vrot.lane.b32.xlu0 %v363, 64
        %v377 = vpop.permute.xlu0 %376
        %vm382 = vcmask 785920
        %383 = vst.msk [vmem:[%s110] sm:$0xff] %vm382, %v371
        %384 = vst.msk [vmem:[%s110 + $0x8] sm:$0xff] %vm382, %v373
        %385 = vst.msk [vmem:[%s110 + $0x10] sm:$0xff] %vm382, %v375
        %386 = vst.msk [vmem:[%s110 + $0x18] sm:$0xff] %vm382, %v377
        %387 = vrot.lane.b32.xlu0 %v348, 96
        %v388 = vpop.permute.xlu0 %387
        %389 = vrot.lane.b32.xlu0 %v353, 96
        %v390 = vpop.permute.xlu0 %389
        %391 = vrot.lane.b32.xlu0 %v358, 96
        %v392 = vpop.permute.xlu0 %391
        %393 = vrot.lane.b32.xlu0 %v363, 96
        %v394 = vpop.permute.xlu0 %393
        %vm399 = vcmask 1048320
        %400 = vst.msk [vmem:[%s110] sm:$0xff] %vm399, %v388
        %401 = vst.msk [vmem:[%s110 + $0x8] sm:$0xff] %vm399, %v390
        %402 = vst.msk [vmem:[%s110 + $0x10] sm:$0xff] %vm399, %v392
        %403 = vst.msk [vmem:[%s110 + $0x18] sm:$0xff] %vm399, %v394
        %s404 = sand.u32 %s49, 1
        %s405 = scalar_lea.sflag [#allocation3], %s404
        %s406 = sand.u32 %s49, 1
        %s407 = smul.addr %s406, 32
        %s408 = scalar_lea.vmem [#allocation2], %s407
        // Predicated region
        $region25: #{tpu_custom_call.1} parent=23 // pred_check
          %p409 = pneg %p59
        $region26: #{tpu_custom_call.1} parent=23 // pred_check_branch
          %411 = sbr.rel (%p409) target = $region28
        $region27: #{tpu_custom_call.1} parent=23 // pred_region
          %s412 = smul.u32 4, %s15
          %s414 = ssub.s32 512, 512
          %415 = vsyncadd %s405, %s414
          %s416 = smul.addr %s412, 128
          %s417 = scalar_lea.hbm %s1, %s416
          %s418 = sshll.u32 %s408, 4
          %s419 = int_to_ptr.vmem [resolvable:$true] %s418
          %424 = dma.vmem_to_hbm [thread:$0]  %s419, 512, %s417, %s405, 128, 128, 8
        $region28: #{tpu_custom_call.1} parent=23 // pred_fallthru
          _
      $region24: #{tpu_custom_call.1} parent=5 // pred_fallthru
        _
      %p425 = scmp.le.s32.totalorder 2, %s10
      // Predicated region
      $region29: #{tpu_custom_call.1} parent=5 // pred_check
        %p426 = pneg %p425
      $region30: #{tpu_custom_call.1} parent=5 // pred_check_branch
        %428 = sbr.rel (%p426) target = $region32
      $region31: #{tpu_custom_call.1} parent=5 // pred_region
        %s429 = ssub.s32 %s10, 2
        // Predicated region
        $region33: #{tpu_custom_call.1} parent=31 // pred_check
          %p430 = pneg %p65
        $region34: #{tpu_custom_call.1} parent=31 // pred_check_branch
          %432 = sbr.rel (%p430) target = $region36
        $region35: #{tpu_custom_call.1} parent=31 // pred_region
          %s433 = sand.u32 %s50, 1
          %s434 = scalar_lea.sflag [#allocation3], %s433
          %s435 = sand.u32 %s50, 1
          %s436 = smul.addr %s435, 32
          %s437 = scalar_lea.vmem [#allocation2], %s436
          %438 = dma.done %s434, 512
        $region36: #{tpu_custom_call.1} parent=31 // pred_fallthru
          _
      $region32: #{tpu_custom_call.1} parent=5 // pred_fallthru
        _
    $region6: #{tpu_custom_call.1} parent=1 // loop_footer
      %s14 = sadd.s32 1, %s10
    $region7: #{tpu_custom_call.1} parent=1 // loop_footer_branch
      %9 = sbr.rel target = $region3
    $region8: #{tpu_custom_call.1} parent=1 // loop_exit
      _
    %439 = vsyncpa [#allocation3], 1
    %s440 = scalar_lea.sflag [#allocation3], 1
    %441 = vsyncpa %s440, 1

</llo_original>
